<compile_context>
chip_gen: v7x
topology: tpu7x:2x2x1
jax: 0.10.0
libtpu: 0.0.40
codegen_flags: <defaults>
</compile_context>

<pallas_src>
import jax
import jax.numpy as jnp
from jax.experimental import pallas as pl
from jax.experimental.pallas import tpu as pltpu


def policy_kernel(idx_ref, wb_ref, o_ref):
    # idx_ref : SMEM (B,) int32            -- flattened positions (row*width+col)
    # wb_ref  : VMEM (obs_space, out_dim)  -- W^T with bias folded in (fully resident)
    # o_ref   : VMEM (B, out_dim) f32      -- softmax probabilities (one block)
    batch = o_ref.shape[0]

    # one_hot(idx) @ W^T + b  ==  row select of (W^T + b): pure sublane slice,
    # no MXU, no iota/compare, no data-dependent DMA.  B is a small static
    # constant, so a fully unrolled static loop of VMEM row copies is cheap.
    for b in range(batch):
        o_ref[pl.ds(b, 1), :] = wb_ref[pl.ds(idx_ref[b], 1), :]

    # Numerically-stable softmax vectorized over the whole (B, out_dim) block:
    # one XLU max, one EUP exp, one XLU sum, one reciprocal for all B states.
    logits = o_ref[...]
    m = jnp.max(logits, axis=-1, keepdims=True)
    e = jnp.exp(logits - m)
    denom = jnp.sum(e, axis=-1, keepdims=True)
    o_ref[...] = e * pl.reciprocal(denom, approx=False)


@jax.jit
def policy_net_forward_batched(sq_idx, wb):
    """Batched PolicyNet forward.

    sq_idx : (B,) int32                 flattened positions (row*width + col)
    wb     : (obs_space, out_dim) f32   == fc1.weight^T + fc1.bias[None, :]
    returns (B, out_dim) softmax probabilities.
    """
    obs_space, out_dim = wb.shape
    batch = sq_idx.shape[0]

    # Clamp on device so an out-of-range (row, col) cannot produce an OOB
    # sublane slice inside the kernel (TPU VMEM has no runtime bounds check).
    sq_idx = jnp.clip(sq_idx.astype(jnp.int32), 0, obs_space - 1)

    grid_spec = pltpu.PrefetchScalarGridSpec(
        num_scalar_prefetch=1,          # sq_idx lands in SMEM before the body runs
        grid=(1,),                      # single step: whole problem in one body
        in_specs=[
            # Entire bias-folded W^T resident in VMEM (4 KB): constant index,
            # fetched exactly once.
            pl.BlockSpec((obs_space, out_dim), lambda i, idx: (0, 0)),
        ],
        # One full-block, single-store output: block shape == full array dims.
        out_specs=pl.BlockSpec((batch, out_dim), lambda i, idx: (0, 0)),
    )

    return pl.pallas_call(
        policy_kernel,
        out_shape=jax.ShapeDtypeStruct((batch, out_dim), jnp.float32),
        grid_spec=grid_spec,
    )(sq_idx, wb)


def policy_net_forward(inp, wb, *, width):
    """Single-state forward matching PolicyNet.forward((row, col)) -> (1, out_dim)."""
    row, col = inp
    sq_idx = (
        jnp.asarray(row, jnp.int32) * width + jnp.asarray(col, jnp.int32)
    ).reshape(1)
    return policy_net_forward_batched(sq_idx, wb)


if __name__ == "__main__":
    # Module-consistent small shapes: height x width grid, out_dim actions.
    height, width, out_dim = 8, 16, 8
    obs_space = height * width  # 128
    batch = 8

    key = jax.random.PRNGKey(0)
    k_pos, k_w, k_bias = jax.random.split(key, 3)

    # Parameters prepared ONCE (transpose + bias fold not redone per call).
    # NOTE: the PyTorch module zero-initializes fc1.weight; the test uses a
    # nonzero random W so the row-select/index path is actually exercised.
    w = jax.random.normal(k_w, (out_dim, obs_space), dtype=jnp.float32) * 0.1
    w_t = jnp.asarray(w.T, dtype=jnp.float32)              # (obs_space, out_dim)
    bound = 1.0 / jnp.sqrt(jnp.float32(obs_space))
    bias = jax.random.uniform(
        k_bias, (out_dim,), minval=-bound, maxval=bound, dtype=jnp.float32
    )
    wb = w_t + bias[None, :]                                # bias folded in

    # Batch of (row, col) positions, kept on device (no host round-trip).
    pos = jax.random.randint(k_pos, (batch, 2), 0, jnp.array([height, width]))
    sq_idx = (pos[:, 0] * width + pos[:, 1]).astype(jnp.int32)

    probs = policy_net_forward_batched(sq_idx, wb)
    probs = jax.block_until_ready(probs)

    # Pure-JAX reference (original one-hot + matmul + bias formulation).
    one_hot = jax.nn.one_hot(sq_idx, obs_space, dtype=jnp.float32)  # (B, obs)
    ref = jax.nn.softmax(one_hot @ w_t + bias[None, :], axis=-1)

    assert probs.shape == (batch, out_dim)
    assert jnp.allclose(probs, ref, atol=1e-6, rtol=1e-6)
    assert jnp.allclose(jnp.sum(probs, axis=-1), 1.0, atol=1e-5)

    # Module-style single-state call: forward((row, col)) -> (1, out_dim).
    single = policy_net_forward((pos[0, 0], pos[0, 1]), wb, width=width)
    single = jax.block_until_ready(single)
    assert single.shape == (1, out_dim)
    assert jnp.allclose(single, ref[:1], atol=1e-6, rtol=1e-6)

    print("KERNEL_OK")
</pallas_src>

<mosaic_0001>
module attributes {stable_mosaic.version = 11 : i64} {
  func.func @policy_kernel(%arg0: i32, %arg1: memref<8xi32, #tpu.memory_space<smem>>, %arg2: memref<128x8xf32, #tpu.memory_space<vmem>>, %arg3: memref<8x8xf32, #tpu.memory_space<vmem>>) attributes {dimension_semantics = [#tpu.dimension_semantics<arbitrary>], iteration_bounds = array<i64: 1>, scalar_prefetch = 1 : i64, scratch_operands = 0 : i64, tpu.core_type = #tpu.core_type<tc>, window_params = [{pipeline_mode = #tpu.pipeline_mode<synchronous>, transform_indices = @transform_0, window_bounds = array<i64: 128, 8>}, {pipeline_mode = #tpu.pipeline_mode<synchronous>, transform_indices = @transform_1, window_bounds = array<i64: 8, 8>}]} {
    %c0 = arith.constant 0 : index
    %0 = memref.load %arg1[%c0] : memref<8xi32, #tpu.memory_space<smem>>
    %1 = arith.index_cast %0 : i32 to index
    %c0_0 = arith.constant 0 : index
    %2 = vector.load %arg2[%1, %c0_0] : memref<128x8xf32, #tpu.memory_space<vmem>>, vector<1x8xf32>
    %c0_1 = arith.constant 0 : index
    %c0_2 = arith.constant 0 : index
    %3 = vector.load %arg3[%c0_1, %c0_2] : memref<8x8xf32, #tpu.memory_space<vmem>>, vector<1x8xf32>
    tpu.vector_store %arg3[%c0_1, %c0_2], %2 {strides = array<i32>} : memref<8x8xf32, #tpu.memory_space<vmem>>, vector<1x8xf32>,
    %c1 = arith.constant 1 : index
    %4 = memref.load %arg1[%c1] : memref<8xi32, #tpu.memory_space<smem>>
    %5 = arith.index_cast %4 : i32 to index
    %c0_3 = arith.constant 0 : index
    %6 = vector.load %arg2[%5, %c0_3] : memref<128x8xf32, #tpu.memory_space<vmem>>, vector<1x8xf32>
    %c1_4 = arith.constant 1 : index
    %c0_5 = arith.constant 0 : index
    %7 = vector.load %arg3[%c1_4, %c0_5] : memref<8x8xf32, #tpu.memory_space<vmem>>, vector<1x8xf32>
    tpu.vector_store %arg3[%c1_4, %c0_5], %6 {strides = array<i32>} : memref<8x8xf32, #tpu.memory_space<vmem>>, vector<1x8xf32>,
    %c2 = arith.constant 2 : index
    %8 = memref.load %arg1[%c2] : memref<8xi32, #tpu.memory_space<smem>>
    %9 = arith.index_cast %8 : i32 to index
    %c0_6 = arith.constant 0 : index
    %10 = vector.load %arg2[%9, %c0_6] : memref<128x8xf32, #tpu.memory_space<vmem>>, vector<1x8xf32>
    %c2_7 = arith.constant 2 : index
    %c0_8 = arith.constant 0 : index
    %11 = vector.load %arg3[%c2_7, %c0_8] : memref<8x8xf32, #tpu.memory_space<vmem>>, vector<1x8xf32>
    tpu.vector_store %arg3[%c2_7, %c0_8], %10 {strides = array<i32>} : memref<8x8xf32, #tpu.memory_space<vmem>>, vector<1x8xf32>,
    %c3 = arith.constant 3 : index
    %12 = memref.load %arg1[%c3] : memref<8xi32, #tpu.memory_space<smem>>
    %13 = arith.index_cast %12 : i32 to index
    %c0_9 = arith.constant 0 : index
    %14 = vector.load %arg2[%13, %c0_9] : memref<128x8xf32, #tpu.memory_space<vmem>>, vector<1x8xf32>
    %c3_10 = arith.constant 3 : index
    %c0_11 = arith.constant 0 : index
    %15 = vector.load %arg3[%c3_10, %c0_11] : memref<8x8xf32, #tpu.memory_space<vmem>>, vector<1x8xf32>
    tpu.vector_store %arg3[%c3_10, %c0_11], %14 {strides = array<i32>} : memref<8x8xf32, #tpu.memory_space<vmem>>, vector<1x8xf32>,
    %c4 = arith.constant 4 : index
    %16 = memref.load %arg1[%c4] : memref<8xi32, #tpu.memory_space<smem>>
    %17 = arith.index_cast %16 : i32 to index
    %c0_12 = arith.constant 0 : index
    %18 = vector.load %arg2[%17, %c0_12] : memref<128x8xf32, #tpu.memory_space<vmem>>, vector<1x8xf32>
    %c4_13 = arith.constant 4 : index
    %c0_14 = arith.constant 0 : index
    %19 = vector.load %arg3[%c4_13, %c0_14] : memref<8x8xf32, #tpu.memory_space<vmem>>, vector<1x8xf32>
    tpu.vector_store %arg3[%c4_13, %c0_14], %18 {strides = array<i32>} : memref<8x8xf32, #tpu.memory_space<vmem>>, vector<1x8xf32>,
    %c5 = arith.constant 5 : index
    %20 = memref.load %arg1[%c5] : memref<8xi32, #tpu.memory_space<smem>>
    %21 = arith.index_cast %20 : i32 to index
    %c0_15 = arith.constant 0 : index
    %22 = vector.load %arg2[%21, %c0_15] : memref<128x8xf32, #tpu.memory_space<vmem>>, vector<1x8xf32>
    %c5_16 = arith.constant 5 : index
    %c0_17 = arith.constant 0 : index
    %23 = vector.load %arg3[%c5_16, %c0_17] : memref<8x8xf32, #tpu.memory_space<vmem>>, vector<1x8xf32>
    tpu.vector_store %arg3[%c5_16, %c0_17], %22 {strides = array<i32>} : memref<8x8xf32, #tpu.memory_space<vmem>>, vector<1x8xf32>,
    %c6 = arith.constant 6 : index
    %24 = memref.load %arg1[%c6] : memref<8xi32, #tpu.memory_space<smem>>
    %25 = arith.index_cast %24 : i32 to index
    %c0_18 = arith.constant 0 : index
    %26 = vector.load %arg2[%25, %c0_18] : memref<128x8xf32, #tpu.memory_space<vmem>>, vector<1x8xf32>
    %c6_19 = arith.constant 6 : index
    %c0_20 = arith.constant 0 : index
    %27 = vector.load %arg3[%c6_19, %c0_20] : memref<8x8xf32, #tpu.memory_space<vmem>>, vector<1x8xf32>
    tpu.vector_store %arg3[%c6_19, %c0_20], %26 {strides = array<i32>} : memref<8x8xf32, #tpu.memory_space<vmem>>, vector<1x8xf32>,
    %c7 = arith.constant 7 : index
    %28 = memref.load %arg1[%c7] : memref<8xi32, #tpu.memory_space<smem>>
    %29 = arith.index_cast %28 : i32 to index
    %c0_21 = arith.constant 0 : index
    %30 = vector.load %arg2[%29, %c0_21] : memref<128x8xf32, #tpu.memory_space<vmem>>, vector<1x8xf32>
    %c7_22 = arith.constant 7 : index
    %c0_23 = arith.constant 0 : index
    %31 = vector.load %arg3[%c7_22, %c0_23] : memref<8x8xf32, #tpu.memory_space<vmem>>, vector<1x8xf32>
    tpu.vector_store %arg3[%c7_22, %c0_23], %30 {strides = array<i32>} : memref<8x8xf32, #tpu.memory_space<vmem>>, vector<1x8xf32>,
    %c0_24 = arith.constant 0 : index
    %c0_25 = arith.constant 0 : index
    %32 = vector.load %arg3[%c0_24, %c0_25] : memref<8x8xf32, #tpu.memory_space<vmem>>, vector<8x8xf32>
    %cst = arith.constant dense<0xFF800000> : vector<8xf32>
    %33 = vector.multi_reduction <maximumf>, %32, %cst [1] : vector<8x8xf32> to vector<8xf32>
    %34 = vector.shape_cast %33 : vector<8xf32> to vector<8x1xf32>
    %35 = vector.broadcast %34 : vector<8x1xf32> to vector<8x8xf32>
    %36 = arith.subf %32, %35 : vector<8x8xf32>
    %37 = math.exp %36 : vector<8x8xf32>
    %cst_26 = arith.constant dense<0.000000e+00> : vector<8xf32>
    %38 = vector.multi_reduction <add>, %37, %cst_26 [1] : vector<8x8xf32> to vector<8xf32>
    %39 = vector.shape_cast %38 : vector<8xf32> to vector<8x1xf32>
    %40 = tpu.reciprocal %39 : vector<8x1xf32> -> vector<8x1xf32>
    %41 = vector.broadcast %40 : vector<8x1xf32> to vector<8x8xf32>
    %42 = arith.mulf %37, %41 : vector<8x8xf32>
    %c0_27 = arith.constant 0 : index
    %c0_28 = arith.constant 0 : index
    %43 = vector.load %arg3[%c0_27, %c0_28] : memref<8x8xf32, #tpu.memory_space<vmem>>, vector<8x8xf32>
    tpu.vector_store %arg3[%c0_27, %c0_28], %42 {strides = array<i32>} : memref<8x8xf32, #tpu.memory_space<vmem>>, vector<8x8xf32>,
    return
  }
  func.func @transform_0(%arg0: i32, %arg1: memref<8xi32, #tpu.memory_space<smem>>) -> (i32, i32) {
    %c0_i32 = arith.constant 0 : i32
    %c0_i32_0 = arith.constant 0 : i32
    %c0_i32_1 = arith.constant 0 : i32
    return %c0_i32, %c0_i32_0 : i32, i32
  }
  func.func @transform_1(%arg0: i32, %arg1: memref<8xi32, #tpu.memory_space<smem>>) -> (i32, i32) {
    %c0_i32 = arith.constant 0 : i32
    %c0_i32_0 = arith.constant 0 : i32
    %c0_i32_1 = arith.constant 0 : i32
    return %c0_i32, %c0_i32_0 : i32, i32
  }
}

</mosaic_0001>

<llo_original>
// kernel: policy_net_forward_batched.1
$region0: #{policy_net_forward_batched.1}
  #allocation0 [shape = 'u32[]', space=smem, size = 0x4, offset = 0x4, fixed_abs, tag = 'smem constant byte address 0x4 - core index']
  #allocation1 [shape = 'u32[144,128]{1,0:T(1,128)}', space=vmem, size = 0x12000, scoped, tag = 'internal scratch']
  #allocation2 [shape = 's32[1]{0}', space=sflag, size = 0x4, scoped, tag = 'scoped memory for policy_net_forward_batched.1']
  #allocation3 [shape = 'u8[512]{0}', space=smem, size = 0x200, scoped, tag = 'prefetched SMEM operand 0']
  %s0 = inlined_call_operand.vmem [shape: s32[8], index: 0, kind: input, shape index: {}]
  %s1 = inlined_call_operand.vmem [shape: f32[128,8], index: 1, kind: input, shape index: {}]
  %s2 = inlined_call_operand.hbm [shape: f32[8,8], index: 2, kind: output, shape index: {}]
  %s3 = sld [smem:[#allocation0]]
  $region14: #{policy_net_forward_batched.1} parent=0
    _
  %s5 = ssub.s32 1, %s3
  %s6 = scalar_select 0, %s5, %s3
  %s7 = sshll.u32 %s0, 4
  %s8 = int_to_ptr.vmem [resolvable:$true] %s7
  %10 = dma.vmem_to_smem %s8, 16, [#allocation3], [#allocation2]
  %11 = dma.done [#allocation2], 16
  %12 = sfence
  $region1: #{policy_net_forward_batched.1} parent=0
    #allocation4 [shape = 'u8[4096]{0}', space=vmem, size = 0x1000, scoped, tag = 'output window, operand 0, single buffered']
    #allocation5 [shape = 's32[1]{0}', space=sflag, size = 0x4, scoped, tag = 'scoped memory for policy_net_forward_batched.1']
    %13 = vsyncpa [#allocation5], 0
    // Predicated region
    $region2: #{policy_net_forward_batched.1} parent=1 // pred_check
      _
    $region3: #{policy_net_forward_batched.1} parent=1 // pred_check_branch
      %15 = sbr.rel (0) target = $region5
    $region4: #{policy_net_forward_batched.1} parent=1 // pred_region
      _
    $region5: #{policy_net_forward_batched.1} parent=1 // pred_fallthru
      _
    %s16 = sld [smem:[#allocation3]]
    %s17 = scalar_lea.vmem %s1, %s16
    %v18 = vld [vmem:[%s17] sm:$0x1]
    %vm19 = vcmask 57344
    %20 = vst.msk [vmem:[#allocation4] sm:$0x1] %vm19, %v18
    %s21 = sld [smem:[#allocation3 + $0x1]]
    %s22 = scalar_lea.vmem %s1, %s21
    %v23 = vld [vmem:[%s22] sm:$0x1]
    %24 = vst.msk [vmem:[#allocation4 + $0x1] sm:$0x1] %vm19, %v23
    %s25 = sld [smem:[#allocation3 + $0x2]]
    %s26 = scalar_lea.vmem %s1, %s25
    %v27 = vld [vmem:[%s26] sm:$0x1]
    %28 = vst.msk [vmem:[#allocation4 + $0x2] sm:$0x1] %vm19, %v27
    %s29 = sld [smem:[#allocation3 + $0x3]]
    %s30 = scalar_lea.vmem %s1, %s29
    %v31 = vld [vmem:[%s30] sm:$0x1]
    %32 = vst.msk [vmem:[#allocation4 + $0x3] sm:$0x1] %vm19, %v31
    %s33 = sld [smem:[#allocation3 + $0x4]]
    %s34 = scalar_lea.vmem %s1, %s33
    %v35 = vld [vmem:[%s34] sm:$0x1]
    %36 = vst.msk [vmem:[#allocation4 + $0x4] sm:$0x1] %vm19, %v35
    %s37 = sld [smem:[#allocation3 + $0x5]]
    %s38 = scalar_lea.vmem %s1, %s37
    %v39 = vld [vmem:[%s38] sm:$0x1]
    %40 = vst.msk [vmem:[#allocation4 + $0x5] sm:$0x1] %vm19, %v39
    %s41 = sld [smem:[#allocation3 + $0x6]]
    %s42 = scalar_lea.vmem %s1, %s41
    %v43 = vld [vmem:[%s42] sm:$0x1]
    %44 = vst.msk [vmem:[#allocation4 + $0x6] sm:$0x1] %vm19, %v43
    %s45 = sld [smem:[#allocation3 + $0x7]]
    %s46 = scalar_lea.vmem %s1, %s45
    %v47 = vld [vmem:[%s46] sm:$0x1]
    %48 = vst.msk [vmem:[#allocation4 + $0x7] sm:$0x1] %vm19, %v47
    %v49 = vld [vmem:[#allocation4] sm:$0xff]
    %vm50 = vcmask 64512
    %v51 = vsel %vm50, %v49, -inf
    %52 = vmax.xlane.f32.xlu0 %v51
    %v53 = vpop.xlane.xlu0 %52
    %v54 = vsub.f32 %v49, %v53
    %v55 = vmul.f32 %v54, 1.442695
    %v56 = vpow.pop %v55
    %v57 = vsel %vm50, %v56, 0.0
    %58 = vadd.xlane.f32.xlu0 %v57
    %v59 = vpop.xlane.xlu0 %58
    %v60 = vrcp.pop %v59
    %v61 = vmul.f32 %v56, %v60
    %62 = vst.msk [vmem:[#allocation4] sm:$0xff] %vm50, %v61
    // Predicated region
    $region6: #{policy_net_forward_batched.1} parent=1 // pred_check
      _
    $region7: #{policy_net_forward_batched.1} parent=1 // pred_check_branch
      %64 = sbr.rel (0) target = $region9
    $region8: #{policy_net_forward_batched.1} parent=1 // pred_region
      %s66 = ssub.s32 128, 128
      %67 = vsyncadd [#allocation5], %s66
      %s69 = sshll.u32 [#allocation4], 4
      %s70 = int_to_ptr.vmem [resolvable:$true] %s69
      %72 = dma.vmem_to_hbm [thread:$0]  %s70, 128, %s2, [#allocation5]
    $region9: #{policy_net_forward_batched.1} parent=1 // pred_fallthru
      _
    // Predicated region
    $region10: #{policy_net_forward_batched.1} parent=1 // pred_check
      _
    $region11: #{policy_net_forward_batched.1} parent=1 // pred_check_branch
      %74 = sbr.rel (0) target = $region13
    $region12: #{policy_net_forward_batched.1} parent=1 // pred_region
      %75 = dma.done [#allocation5], 128
    $region13: #{policy_net_forward_batched.1} parent=1 // pred_fallthru
      _
    %76 = vsyncpa [#allocation5], 1

</llo_original>
